<compile_context>
chip_gen: v6e
topology: v6e:2x2x1
jax: 0.10.0
libtpu: 0.0.40
codegen_flags: <defaults>
</compile_context>

<pallas_src>
import functools

import jax
import jax.numpy as jnp
from jax.experimental import pallas as pl
from jax.experimental.pallas import tpu as pltpu

SUBLANE = 8


def _round_up(x, m):
    return ((x + m - 1) // m) * m


def _cdiv(a, b):
    return -(-a // b)


def _res_mlp_kernel(n_linear, *refs):
    """Kernel body.

    refs layout:
      x_ref, yphy_ref,
      w0_ref, b0_ref, ..., w{L-1}_ref, b{L-1}_ref,   (L = n_linear linears)
      o_ref
    """
    x_ref = refs[0]
    yphy_ref = refs[1]
    o_ref = refs[-1]
    param_refs = refs[2:-1]

    h = x_ref[...].astype(jnp.float32)
    for li in range(n_linear):
        w_ref = param_refs[2 * li]
        b_ref = param_refs[2 * li + 1]
        # Cast the activation to the weight dtype (no-op for f32 weights) so
        # bf16 weights hit the native MXU path; accumulate in f32.
        h = jnp.dot(h.astype(w_ref.dtype), w_ref[...],
                    preferred_element_type=jnp.float32)
        h = h + b_ref[...].astype(jnp.float32)
        if li < n_linear - 1:  # ReLU on all but the final (output) linear
            h = jnp.maximum(h, 0.0)

    # Residual add with the physics prior.
    o_ref[...] = (h + yphy_ref[...].astype(jnp.float32)).astype(o_ref.dtype)


def res_forward(x, yphy, params, *, batch_tile=None, param_dtype=None):
    """RES forward: ([Linear->ReLU]*n -> Linear)(x) + yphy.

    params: list of (W, b) with W of shape (in_dim, out_dim), b of shape
    (1, out_dim). param_dtype optionally casts weights (e.g. bf16) — if you
    call repeatedly, do the cast once outside and pass param_dtype=None.
    """
    B, input_dim = x.shape
    output_dim = params[-1][0].shape[1]
    assert yphy.shape == (B, output_dim)
    n_linear = len(params)
    out_dtype = x.dtype

    if param_dtype is not None:
        params = [(W.astype(param_dtype), b.astype(param_dtype))
                  for (W, b) in params]
    flat_params = []
    for W, b in params:
        flat_params.append(W)
        flat_params.append(b.reshape(1, -1))

    # --- batch tiling: >= 4 grid steps when possible (DMA/compute overlap on
    #     v5e/v6e, dual-TensorCore sharding on v7x), tile capped at 512 rows.
    if batch_tile is None:
        batch_tile = min(512, _round_up(_cdiv(B, 4), SUBLANE))
    batch_tile = max(SUBLANE, _round_up(batch_tile, SUBLANE))
    batch_tile = min(batch_tile, _round_up(B, SUBLANE))
    grid = (_cdiv(B, batch_tile),)

    in_specs = [
        pl.BlockSpec((batch_tile, input_dim), lambda i: (i, 0)),    # x
        pl.BlockSpec((batch_tile, output_dim), lambda i: (i, 0)),   # yphy
    ]
    for p in flat_params:
        # Grid-invariant full-extent block: DMA'd once, VMEM-resident.
        in_specs.append(pl.BlockSpec(p.shape, lambda i: (0, 0)))
    out_specs = pl.BlockSpec((batch_tile, output_dim), lambda i: (i, 0))

    # --- advisory cost estimate (this kernel is HBM-bandwidth bound).
    dims = [input_dim] + [W.shape[1] for (W, _b) in params]
    flops = 2 * B * sum(a * b for a, b in zip(dims[:-1], dims[1:]))
    param_bytes = sum(int(p.size) * p.dtype.itemsize for p in flat_params)
    act_bytes = (B * (input_dim + output_dim) * x.dtype.itemsize
                 + B * output_dim * jnp.dtype(out_dtype).itemsize)
    cost = pl.CostEstimate(flops=int(flops), transcendentals=0,
                           bytes_accessed=int(act_bytes + param_bytes))

    # --- generation-aware VMEM budget: double-buffered activation tiles +
    #     resident params (x2 for default buffering) + headroom, capped at
    #     ~85% of physical per-core VMEM (v7x: ~54 MiB, v5e/v6e: ~108 MiB).
    tile_bytes = (batch_tile * (input_dim + output_dim) * x.dtype.itemsize
                  + batch_tile * output_dim * jnp.dtype(out_dtype).itemsize)
    vmem_needed = 2 * tile_bytes + 2 * param_bytes + (2 << 20)
    try:
        vmem_cap = int(pltpu.get_tpu_info().vmem_capacity_bytes)
    except Exception:
        vmem_cap = 64 << 20  # conservative fallback (v7x per-core VMEM)
    vmem_limit = int(min(max(vmem_needed, 16 << 20), int(vmem_cap * 0.85)))

    kernel = functools.partial(_res_mlp_kernel, n_linear)

    return pl.pallas_call(
        kernel,
        out_shape=jax.ShapeDtypeStruct((B, output_dim), out_dtype),
        grid=grid,
        in_specs=in_specs,
        out_specs=out_specs,
        compiler_params=pltpu.CompilerParams(
            dimension_semantics=("parallel",),
            vmem_limit_bytes=vmem_limit,
        ),
        cost_estimate=cost,
    )(x, yphy, *flat_params)


def init_res_params(key, input_dim, output_dim, layersizes):
    """Deterministic parameter init mirroring RES.__init__ layer shapes."""
    dims = [input_dim] + list(layersizes) + [output_dim]
    params = []
    for i in range(len(dims) - 1):
        key, kw, kb = jax.random.split(key, 3)
        fan_in = dims[i]
        bound = 1.0 / jnp.sqrt(fan_in)
        W = jax.random.uniform(kw, (dims[i], dims[i + 1]), jnp.float32,
                               -bound, bound)
        b = jax.random.uniform(kb, (1, dims[i + 1]), jnp.float32,
                               -bound, bound)
        params.append((W, b))
    return params


def res_forward_ref(x, yphy, params):
    """Pure-JAX reference for correctness check."""
    h = x
    for li, (W, b) in enumerate(params):
        h = h @ W + b
        if li < len(params) - 1:
            h = jnp.maximum(h, 0.0)
    return h + yphy


if __name__ == "__main__":
    key = jax.random.PRNGKey(0)

    batch = 8
    input_dim = 16
    layersizes = [32, 32]
    output_dim = 16

    kx, ky, kp = jax.random.split(key, 3)
    x = jax.random.normal(kx, (batch, input_dim), jnp.float32)
    yphy = jax.random.normal(ky, (batch, output_dim), jnp.float32)
    params = init_res_params(kp, input_dim, output_dim, layersizes)

    out = res_forward(x, yphy, params)
    out = jax.block_until_ready(out)

    ref = res_forward_ref(x, yphy, params)
    assert out.shape == (batch, output_dim)
    assert jnp.allclose(out, ref, atol=1e-5, rtol=1e-5), "mismatch vs reference"

    print("KERNEL_OK")
</pallas_src>

<mosaic_0001>
module attributes {stable_mosaic.version = 11 : i64} {
  func.func @_res_mlp_kernel(%arg0: i32, %arg1: memref<8x16xf32, #tpu.memory_space<vmem>>, %arg2: memref<8x16xf32, #tpu.memory_space<vmem>>, %arg3: memref<16x32xf32, #tpu.memory_space<vmem>>, %arg4: memref<1x32xf32, #tpu.memory_space<vmem>>, %arg5: memref<32x32xf32, #tpu.memory_space<vmem>>, %arg6: memref<1x32xf32, #tpu.memory_space<vmem>>, %arg7: memref<32x16xf32, #tpu.memory_space<vmem>>, %arg8: memref<1x16xf32, #tpu.memory_space<vmem>>, %arg9: memref<8x16xf32, #tpu.memory_space<vmem>>) attributes {dimension_semantics = [#tpu.dimension_semantics<parallel>], iteration_bounds = array<i64: 1>, scalar_prefetch = 0 : i64, scratch_operands = 0 : i64, tpu.core_type = #tpu.core_type<tc>, window_params = [{transform_indices = @transform_0, window_bounds = array<i64: 8, 16>}, {transform_indices = @transform_1, window_bounds = array<i64: 8, 16>}, {pipeline_mode = #tpu.pipeline_mode<synchronous>, transform_indices = @transform_2, window_bounds = array<i64: 16, 32>}, {pipeline_mode = #tpu.pipeline_mode<synchronous>, transform_indices = @transform_3, window_bounds = array<i64: 1, 32>}, {pipeline_mode = #tpu.pipeline_mode<synchronous>, transform_indices = @transform_4, window_bounds = array<i64: 32, 32>}, {pipeline_mode = #tpu.pipeline_mode<synchronous>, transform_indices = @transform_5, window_bounds = array<i64: 1, 32>}, {pipeline_mode = #tpu.pipeline_mode<synchronous>, transform_indices = @transform_6, window_bounds = array<i64: 32, 16>}, {pipeline_mode = #tpu.pipeline_mode<synchronous>, transform_indices = @transform_7, window_bounds = array<i64: 1, 16>}, {transform_indices = @transform_8, window_bounds = array<i64: 8, 16>}]} {
    %c0 = arith.constant 0 : index
    %c0_0 = arith.constant 0 : index
    %0 = vector.load %arg1[%c0, %c0_0] : memref<8x16xf32, #tpu.memory_space<vmem>>, vector<8x16xf32>
    %c0_1 = arith.constant 0 : index
    %c0_2 = arith.constant 0 : index
    %1 = vector.load %arg3[%c0_1, %c0_2] : memref<16x32xf32, #tpu.memory_space<vmem>>, vector<16x32xf32>
    %cst = arith.constant dense<0.000000e+00> : vector<8x32xf32>
    %2 = tpu.matmul %0, %1, %cst {dimension_numbers = #tpu.dot_dimension_numbers<[1], [0], [0], [1], [0, 0, 1, 1], [], []>} : vector<8x16xf32>, vector<16x32xf32>, vector<8x32xf32> -> vector<8x32xf32>
    %c0_3 = arith.constant 0 : index
    %c0_4 = arith.constant 0 : index
    %3 = vector.load %arg4[%c0_3, %c0_4] : memref<1x32xf32, #tpu.memory_space<vmem>>, vector<1x32xf32>
    %4 = vector.broadcast %3 : vector<1x32xf32> to vector<8x32xf32>
    %5 = arith.addf %2, %4 : vector<8x32xf32>
    %cst_5 = arith.constant 0.000000e+00 : f32
    %6 = vector.broadcast %cst_5 : f32 to vector<8x32xf32>
    %7 = arith.maximumf %5, %6 : vector<8x32xf32>
    %c0_6 = arith.constant 0 : index
    %c0_7 = arith.constant 0 : index
    %8 = vector.load %arg5[%c0_6, %c0_7] : memref<32x32xf32, #tpu.memory_space<vmem>>, vector<32x32xf32>
    %cst_8 = arith.constant dense<0.000000e+00> : vector<8x32xf32>
    %9 = tpu.matmul %7, %8, %cst_8 {dimension_numbers = #tpu.dot_dimension_numbers<[1], [0], [0], [1], [0, 0, 1, 1], [], []>} : vector<8x32xf32>, vector<32x32xf32>, vector<8x32xf32> -> vector<8x32xf32>
    %c0_9 = arith.constant 0 : index
    %c0_10 = arith.constant 0 : index
    %10 = vector.load %arg6[%c0_9, %c0_10] : memref<1x32xf32, #tpu.memory_space<vmem>>, vector<1x32xf32>
    %11 = vector.broadcast %10 : vector<1x32xf32> to vector<8x32xf32>
    %12 = arith.addf %9, %11 : vector<8x32xf32>
    %cst_11 = arith.constant 0.000000e+00 : f32
    %13 = vector.broadcast %cst_11 : f32 to vector<8x32xf32>
    %14 = arith.maximumf %12, %13 : vector<8x32xf32>
    %c0_12 = arith.constant 0 : index
    %c0_13 = arith.constant 0 : index
    %15 = vector.load %arg7[%c0_12, %c0_13] : memref<32x16xf32, #tpu.memory_space<vmem>>, vector<32x16xf32>
    %cst_14 = arith.constant dense<0.000000e+00> : vector<8x16xf32>
    %16 = tpu.matmul %14, %15, %cst_14 {dimension_numbers = #tpu.dot_dimension_numbers<[1], [0], [0], [1], [0, 0, 1, 1], [], []>} : vector<8x32xf32>, vector<32x16xf32>, vector<8x16xf32> -> vector<8x16xf32>
    %c0_15 = arith.constant 0 : index
    %c0_16 = arith.constant 0 : index
    %17 = vector.load %arg8[%c0_15, %c0_16] : memref<1x16xf32, #tpu.memory_space<vmem>>, vector<1x16xf32>
    %18 = vector.broadcast %17 : vector<1x16xf32> to vector<8x16xf32>
    %19 = arith.addf %16, %18 : vector<8x16xf32>
    %c0_17 = arith.constant 0 : index
    %c0_18 = arith.constant 0 : index
    %20 = vector.load %arg2[%c0_17, %c0_18] : memref<8x16xf32, #tpu.memory_space<vmem>>, vector<8x16xf32>
    %21 = arith.addf %19, %20 : vector<8x16xf32>
    %c0_19 = arith.constant 0 : index
    %c0_20 = arith.constant 0 : index
    %22 = vector.load %arg9[%c0_19, %c0_20] : memref<8x16xf32, #tpu.memory_space<vmem>>, vector<8x16xf32>
    tpu.vector_store %arg9[%c0_19, %c0_20], %21 {strides = array<i32>} : memref<8x16xf32, #tpu.memory_space<vmem>>, vector<8x16xf32>,
    return
  }
  func.func @transform_0(%arg0: i32) -> (i32, i32) {
    %c0_i32 = arith.constant 0 : i32
    %c0_i32_0 = arith.constant 0 : i32
    return %arg0, %c0_i32 : i32, i32
  }
  func.func @transform_1(%arg0: i32) -> (i32, i32) {
    %c0_i32 = arith.constant 0 : i32
    %c0_i32_0 = arith.constant 0 : i32
    return %arg0, %c0_i32 : i32, i32
  }
  func.func @transform_2(%arg0: i32) -> (i32, i32) {
    %c0_i32 = arith.constant 0 : i32
    %c0_i32_0 = arith.constant 0 : i32
    %c0_i32_1 = arith.constant 0 : i32
    return %c0_i32, %c0_i32_0 : i32, i32
  }
  func.func @transform_3(%arg0: i32) -> (i32, i32) {
    %c0_i32 = arith.constant 0 : i32
    %c0_i32_0 = arith.constant 0 : i32
    %c0_i32_1 = arith.constant 0 : i32
    return %c0_i32, %c0_i32_0 : i32, i32
  }
  func.func @transform_4(%arg0: i32) -> (i32, i32) {
    %c0_i32 = arith.constant 0 : i32
    %c0_i32_0 = arith.constant 0 : i32
    %c0_i32_1 = arith.constant 0 : i32
    return %c0_i32, %c0_i32_0 : i32, i32
  }
  func.func @transform_5(%arg0: i32) -> (i32, i32) {
    %c0_i32 = arith.constant 0 : i32
    %c0_i32_0 = arith.constant 0 : i32
    %c0_i32_1 = arith.constant 0 : i32
    return %c0_i32, %c0_i32_0 : i32, i32
  }
  func.func @transform_6(%arg0: i32) -> (i32, i32) {
    %c0_i32 = arith.constant 0 : i32
    %c0_i32_0 = arith.constant 0 : i32
    %c0_i32_1 = arith.constant 0 : i32
    return %c0_i32, %c0_i32_0 : i32, i32
  }
  func.func @transform_7(%arg0: i32) -> (i32, i32) {
    %c0_i32 = arith.constant 0 : i32
    %c0_i32_0 = arith.constant 0 : i32
    %c0_i32_1 = arith.constant 0 : i32
    return %c0_i32, %c0_i32_0 : i32, i32
  }
  func.func @transform_8(%arg0: i32) -> (i32, i32) {
    %c0_i32 = arith.constant 0 : i32
    %c0_i32_0 = arith.constant 0 : i32
    return %arg0, %c0_i32 : i32, i32
  }
}

</mosaic_0001>

<llo_original>
// kernel: tpu_custom_call.1
$region0: #{tpu_custom_call.1}
  #allocation0 [shape = 'u32[]', space=smem, size = 0x4, offset = 0x4, fixed_abs, tag = 'smem constant byte address 0x4 - core index']
  #allocation1 [shape = 'u32[144,128]{1,0:T(1,128)}', space=vmem, size = 0x12000, scoped, tag = 'internal scratch']
  %s0 = inlined_call_operand.hbm [shape: f32[8,16], index: 0, kind: input, shape index: {}]
  %s1 = inlined_call_operand.hbm [shape: f32[8,16], index: 1, kind: input, shape index: {}]
  %s2 = inlined_call_operand.vmem [shape: f32[16,32], index: 2, kind: input, shape index: {}]
  %s3 = inlined_call_operand.vmem [shape: f32[1,32], index: 3, kind: input, shape index: {}]
  %s4 = inlined_call_operand.vmem [shape: f32[32,32], index: 4, kind: input, shape index: {}]
  %s5 = inlined_call_operand.vmem [shape: f32[1,32], index: 5, kind: input, shape index: {}]
  %s6 = inlined_call_operand.vmem [shape: f32[32,16], index: 6, kind: input, shape index: {}]
  %s7 = inlined_call_operand.vmem [shape: f32[1,16], index: 7, kind: input, shape index: {}]
  %s8 = inlined_call_operand.hbm [shape: f32[8,16], index: 8, kind: output, shape index: {}]
  %s9 = sld [smem:[#allocation0]]
  $region50: #{tpu_custom_call.1} parent=0
    _
  %s11 = ssub.s32 1, %s9
  %s12 = scalar_select 0, %s11, %s9
  $region1: #{tpu_custom_call.1} parent=0
    #allocation2 [shape = 'u8[4096]{0}', space=vmem, size = 0x1000, scoped, tag = 'input window, operand 0, single buffered']
    #allocation3 [shape = 's32[1]{0}', space=sflag, size = 0x4, scoped, tag = 'scoped memory for tpu_custom_call.1']
    #allocation4 [shape = 's32[1]{0}', space=sflag, size = 0x4, scoped, tag = 'scoped memory for tpu_custom_call.1']
    #allocation5 [shape = 'u8[4096]{0}', space=vmem, size = 0x1000, scoped, tag = 'input window, operand 1, single buffered']
    #allocation6 [shape = 's32[1]{0}', space=sflag, size = 0x4, scoped, tag = 'scoped memory for tpu_custom_call.1']
    #allocation7 [shape = 'u8[4096]{0}', space=vmem, size = 0x1000, scoped, tag = 'output window, operand 0, single buffered']
    %13 = vsyncpa [#allocation3], 0
    %14 = vsyncpa [#allocation6], 0
    %15 = vsyncpa [#allocation4], 0
    // Predicated region
    $region2: #{tpu_custom_call.1} parent=1 // pred_check
      _
    $region3: #{tpu_custom_call.1} parent=1 // pred_check_branch
      %17 = sbr.rel (0) target = $region5
    $region4: #{tpu_custom_call.1} parent=1 // pred_region
      %s19 = ssub.s32 128, 128
      %20 = vsyncadd [#allocation3], %s19
      %s22 = sshll.u32 [#allocation2], 4
      %s23 = int_to_ptr.vmem [resolvable:$true] %s22
      %25 = dma.hbm_to_vmem [thread:$0]  %s0, 128, %s23, [#allocation3]
    $region5: #{tpu_custom_call.1} parent=1 // pred_fallthru
      _
    // Predicated region
    $region6: #{tpu_custom_call.1} parent=1 // pred_check
      _
    $region7: #{tpu_custom_call.1} parent=1 // pred_check_branch
      %27 = sbr.rel (0) target = $region9
    $region8: #{tpu_custom_call.1} parent=1 // pred_region
      %s29 = ssub.s32 128, 128
      %30 = vsyncadd [#allocation6], %s29
      %s32 = sshll.u32 [#allocation5], 4
      %s33 = int_to_ptr.vmem [resolvable:$true] %s32
      %35 = dma.hbm_to_vmem [thread:$0]  %s1, 128, %s33, [#allocation6]
    $region9: #{tpu_custom_call.1} parent=1 // pred_fallthru
      _
    // Predicated region
    $region10: #{tpu_custom_call.1} parent=1 // pred_check
      _
    $region11: #{tpu_custom_call.1} parent=1 // pred_check_branch
      %37 = sbr.rel (0) target = $region13
    $region12: #{tpu_custom_call.1} parent=1 // pred_region
      _
    $region13: #{tpu_custom_call.1} parent=1 // pred_fallthru
      _
    // Predicated region
    $region14: #{tpu_custom_call.1} parent=1 // pred_check
      _
    $region15: #{tpu_custom_call.1} parent=1 // pred_check_branch
      %39 = sbr.rel (0) target = $region17
    $region16: #{tpu_custom_call.1} parent=1 // pred_region
      _
    $region17: #{tpu_custom_call.1} parent=1 // pred_fallthru
      _
    // Predicated region
    $region18: #{tpu_custom_call.1} parent=1 // pred_check
      _
    $region19: #{tpu_custom_call.1} parent=1 // pred_check_branch
      %41 = sbr.rel (0) target = $region21
    $region20: #{tpu_custom_call.1} parent=1 // pred_region
      _
    $region21: #{tpu_custom_call.1} parent=1 // pred_fallthru
      _
    // Predicated region
    $region22: #{tpu_custom_call.1} parent=1 // pred_check
      _
    $region23: #{tpu_custom_call.1} parent=1 // pred_check_branch
      %43 = sbr.rel (0) target = $region25
    $region24: #{tpu_custom_call.1} parent=1 // pred_region
      _
    $region25: #{tpu_custom_call.1} parent=1 // pred_fallthru
      _
    // Predicated region
    $region26: #{tpu_custom_call.1} parent=1 // pred_check
      _
    $region27: #{tpu_custom_call.1} parent=1 // pred_check_branch
      %45 = sbr.rel (0) target = $region29
    $region28: #{tpu_custom_call.1} parent=1 // pred_region
      _
    $region29: #{tpu_custom_call.1} parent=1 // pred_fallthru
      _
    // Predicated region
    $region30: #{tpu_custom_call.1} parent=1 // pred_check
      _
    $region31: #{tpu_custom_call.1} parent=1 // pred_check_branch
      %47 = sbr.rel (0) target = $region33
    $region32: #{tpu_custom_call.1} parent=1 // pred_region
      _
    $region33: #{tpu_custom_call.1} parent=1 // pred_fallthru
      _
    // Predicated region
    $region34: #{tpu_custom_call.1} parent=1 // pred_check
      _
    $region35: #{tpu_custom_call.1} parent=1 // pred_check_branch
      %49 = sbr.rel (0) target = $region37
    $region36: #{tpu_custom_call.1} parent=1 // pred_region
      %50 = dma.done [#allocation3], 128
    $region37: #{tpu_custom_call.1} parent=1 // pred_fallthru
      _
    // Predicated region
    $region38: #{tpu_custom_call.1} parent=1 // pred_check
      _
    $region39: #{tpu_custom_call.1} parent=1 // pred_check_branch
      %52 = sbr.rel (0) target = $region41
    $region40: #{tpu_custom_call.1} parent=1 // pred_region
      %53 = dma.done [#allocation6], 128
    $region41: #{tpu_custom_call.1} parent=1 // pred_fallthru
      _
    %v54 = vld [vmem:[#allocation2] sm:$0xff]
    %v55 = vld [vmem:[%s2] sm:$0xff]
    %v56 = vld [vmem:[%s2 + $0x8] sm:$0xff]
    %v57 = vld [vmem:[%s3] sm:$0x1]
    %v59 = vlaneseq
    %v60 = vshrl.u32 %v59, 7
    %v61 = vsub.s32 0, %v60
    %v62 = vrot.slane %v57, %v61
    %vm64 = vcmask 130048
    %v66 = vsel %vm64, %v54, 0
    %68 = vmatprep.subr.mxu0 0.0
    %69 = vmatpush1.msra.mxu0 0.0
    %70 = vmatprep.subr.mxu0 0.0
    %71 = vmatpush1.msra.mxu0 0.0
    %72 = vmatprep.subr.mxu0 0.0
    %73 = vmatpush1.msra.mxu0 0.0
    %74 = vmatprep.subr.mxu0 0.0
    %75 = vmatpush1.msra.mxu0 0.0
    %76 = vmatprep.subr.mxu0 0.0
    %77 = vmatpush1.msra.mxu0 0.0
    %78 = vmatprep.subr.mxu0 0.0
    %79 = vmatpush1.msra.mxu0 0.0
    %80 = vmatprep.subr.mxu0 0.0
    %81 = vmatpush1.msra.mxu0 0.0
    %82 = vmatprep.subr.mxu0 0.0
    %83 = vmatpush1.msra.mxu0 0.0
    %84 = vmatprep.subr.mxu0 0.0
    %85 = vmatpush1.msra.mxu0 0.0
    %86 = vmatprep.subr.mxu0 0.0
    %87 = vmatpush1.msra.mxu0 0.0
    %88 = vmatprep.subr.mxu0 0.0
    %89 = vmatpush1.msra.mxu0 0.0
    %90 = vmatprep.subr.mxu0 0.0
    %91 = vmatpush1.msra.mxu0 0.0
    %92 = vmatprep.subr.mxu0 0.0
    %93 = vmatpush1.msra.mxu0 0.0
    %94 = vmatprep.subr.mxu0 0.0
    %95 = vmatpush1.msra.mxu0 0.0
    %96 = vmatprep.subr.mxu0 0.0
    %97 = vmatpush1.msra.mxu0 %v56
    %98 = vmatprep.subr.mxu0 0.0
    %99 = vmatpush1.msra.mxu0 %v55
    %100 = vmatprep.subr.mxu0 0.0
    %101 = vmatpush2.msra.mxu0 0.0
    %102 = vmatprep.subr.mxu0 0.0
    %103 = vmatpush2.msra.mxu0 0.0
    %104 = vmatprep.subr.mxu0 0.0
    %105 = vmatpush2.msra.mxu0 0.0
    %106 = vmatprep.subr.mxu0 0.0
    %107 = vmatpush2.msra.mxu0 0.0
    %108 = vmatprep.subr.mxu0 0.0
    %109 = vmatpush2.msra.mxu0 0.0
    %110 = vmatprep.subr.mxu0 0.0
    %111 = vmatpush2.msra.mxu0 0.0
    %112 = vmatprep.subr.mxu0 0.0
    %113 = vmatpush2.msra.mxu0 0.0
    %114 = vmatprep.subr.mxu0 0.0
    %115 = vmatpush2.msra.mxu0 0.0
    %116 = vmatprep.subr.mxu0 0.0
    %117 = vmatpush2.msra.mxu0 0.0
    %118 = vmatprep.subr.mxu0 0.0
    %119 = vmatpush2.msra.mxu0 0.0
    %120 = vmatprep.subr.mxu0 0.0
    %121 = vmatpush2.msra.mxu0 0.0
    %122 = vmatprep.subr.mxu0 0.0
    %123 = vmatpush2.msra.mxu0 0.0
    %124 = vmatprep.subr.mxu0 0.0
    %125 = vmatpush2.msra.mxu0 0.0
    %126 = vmatprep.subr.mxu0 0.0
    %127 = vmatpush2.msra.mxu0 0.0
    %128 = vmatprep.subr.mxu0 0.0
    %129 = vmatpush2.msra.mxu0 0.0
    %130 = vmatprep.subr.mxu0 0.0
    %131 = vmatpush2.msra.mxu0 0.0
    %132 = vmatprep.mubr.f32.mxu0 0.0
    %133 = vmatmul.mubr.f32.gmra.mxu0 %v66
    %v134 = vpop.f32.mrf.mxu0
    %v135 = vadd.f32 %v62, %v134
    %v136 = vpop.f32.mrf.mxu0
    %137 = vdwg.mxu0
    %v138 = vmax.f32 %v135, 0.0
    %v139 = vld [vmem:[%s4] sm:$0xff]
    %v140 = vld [vmem:[%s4 + $0x8] sm:$0xff]
    %v141 = vld [vmem:[%s4 + $0x10] sm:$0xff]
    %v142 = vld [vmem:[%s4 + $0x18] sm:$0xff]
    %v143 = vld [vmem:[%s5] sm:$0x1]
    %v145 = vlaneseq
    %v146 = vshrl.u32 %v145, 7
    %v147 = vsub.s32 0, %v146
    %v148 = vrot.slane %v143, %v147
    %vm150 = vcmask 261120
    %v152 = vsel %vm150, %v138, 0
    %154 = vmatprep.subr.mxu0 0.0
    %155 = vmatpush1.msra.mxu0 0.0
    %156 = vmatprep.subr.mxu0 0.0
    %157 = vmatpush1.msra.mxu0 0.0
    %158 = vmatprep.subr.mxu0 0.0
    %159 = vmatpush1.msra.mxu0 0.0
    %160 = vmatprep.subr.mxu0 0.0
    %161 = vmatpush1.msra.mxu0 0.0
    %162 = vmatprep.subr.mxu0 0.0
    %163 = vmatpush1.msra.mxu0 0.0
    %164 = vmatprep.subr.mxu0 0.0
    %165 = vmatpush1.msra.mxu0 0.0
    %166 = vmatprep.subr.mxu0 0.0
    %167 = vmatpush1.msra.mxu0 0.0
    %168 = vmatprep.subr.mxu0 0.0
    %169 = vmatpush1.msra.mxu0 0.0
    %170 = vmatprep.subr.mxu0 0.0
    %171 = vmatpush1.msra.mxu0 0.0
    %172 = vmatprep.subr.mxu0 0.0
    %173 = vmatpush1.msra.mxu0 0.0
    %174 = vmatprep.subr.mxu0 0.0
    %175 = vmatpush1.msra.mxu0 0.0
    %176 = vmatprep.subr.mxu0 0.0
    %177 = vmatpush1.msra.mxu0 0.0
    %178 = vmatprep.subr.mxu0 0.0
    %179 = vmatpush1.msra.mxu0 %v142
    %180 = vmatprep.subr.mxu0 0.0
    %181 = vmatpush1.msra.mxu0 %v141
    %182 = vmatprep.subr.mxu0 0.0
    %183 = vmatpush1.msra.mxu0 %v140
    %184 = vmatprep.subr.mxu0 0.0
    %185 = vmatpush1.msra.mxu0 %v139
    %186 = vmatprep.subr.mxu0 0.0
    %187 = vmatpush2.msra.mxu0 0.0
    %188 = vmatprep.subr.mxu0 0.0
    %189 = vmatpush2.msra.mxu0 0.0
    %190 = vmatprep.subr.mxu0 0.0
    %191 = vmatpush2.msra.mxu0 0.0
    %192 = vmatprep.subr.mxu0 0.0
    %193 = vmatpush2.msra.mxu0 0.0
    %194 = vmatprep.subr.mxu0 0.0
    %195 = vmatpush2.msra.mxu0 0.0
    %196 = vmatprep.subr.mxu0 0.0
    %197 = vmatpush2.msra.mxu0 0.0
    %198 = vmatprep.subr.mxu0 0.0
    %199 = vmatpush2.msra.mxu0 0.0
    %200 = vmatprep.subr.mxu0 0.0
    %201 = vmatpush2.msra.mxu0 0.0
    %202 = vmatprep.subr.mxu0 0.0
    %203 = vmatpush2.msra.mxu0 0.0
    %204 = vmatprep.subr.mxu0 0.0
    %205 = vmatpush2.msra.mxu0 0.0
    %206 = vmatprep.subr.mxu0 0.0
    %207 = vmatpush2.msra.mxu0 0.0
    %208 = vmatprep.subr.mxu0 0.0
    %209 = vmatpush2.msra.mxu0 0.0
    %210 = vmatprep.subr.mxu0 0.0
    %211 = vmatpush2.msra.mxu0 0.0
    %212 = vmatprep.subr.mxu0 0.0
    %213 = vmatpush2.msra.mxu0 0.0
    %214 = vmatprep.subr.mxu0 0.0
    %215 = vmatpush2.msra.mxu0 0.0
    %216 = vmatprep.subr.mxu0 0.0
    %217 = vmatpush2.msra.mxu0 0.0
    %218 = vmatprep.mubr.f32.mxu0 0.0
    %219 = vmatmul.mubr.f32.gmra.mxu0 %v152
    %v220 = vpop.f32.mrf.mxu0
    %v221 = vadd.f32 %v148, %v220
    %v222 = vpop.f32.mrf.mxu0
    %223 = vdwg.mxu0
    %v224 = vmax.f32 %v221, 0.0
    %v225 = vld [vmem:[%s6] sm:$0xff]
    %v226 = vld [vmem:[%s6 + $0x8] sm:$0xff]
    %v227 = vld [vmem:[%s6 + $0x10] sm:$0xff]
    %v228 = vld [vmem:[%s6 + $0x18] sm:$0xff]
    %v229 = vld [vmem:[%s7] sm:$0x1]
    %v231 = vlaneseq
    %v232 = vshrl.u32 %v231, 7
    %v233 = vsub.s32 0, %v232
    %v234 = vrot.slane %v229, %v233
    %v237 = vsel %vm150, %v224, 0
    %239 = vmatprep.subr.mxu0 0.0
    %240 = vmatpush1.msra.mxu0 0.0
    %241 = vmatprep.subr.mxu0 0.0
    %242 = vmatpush1.msra.mxu0 0.0
    %243 = vmatprep.subr.mxu0 0.0
    %244 = vmatpush1.msra.mxu0 0.0
    %245 = vmatprep.subr.mxu0 0.0
    %246 = vmatpush1.msra.mxu0 0.0
    %247 = vmatprep.subr.mxu0 0.0
    %248 = vmatpush1.msra.mxu0 0.0
    %249 = vmatprep.subr.mxu0 0.0
    %250 = vmatpush1.msra.mxu0 0.0
    %251 = vmatprep.subr.mxu0 0.0
    %252 = vmatpush1.msra.mxu0 0.0
    %253 = vmatprep.subr.mxu0 0.0
    %254 = vmatpush1.msra.mxu0 0.0
    %255 = vmatprep.subr.mxu0 0.0
    %256 = vmatpush1.msra.mxu0 0.0
    %257 = vmatprep.subr.mxu0 0.0
    %258 = vmatpush1.msra.mxu0 0.0
    %259 = vmatprep.subr.mxu0 0.0
    %260 = vmatpush1.msra.mxu0 0.0
    %261 = vmatprep.subr.mxu0 0.0
    %262 = vmatpush1.msra.mxu0 0.0
    %263 = vmatprep.subr.mxu0 0.0
    %264 = vmatpush1.msra.mxu0 %v228
    %265 = vmatprep.subr.mxu0 0.0
    %266 = vmatpush1.msra.mxu0 %v227
    %267 = vmatprep.subr.mxu0 0.0
    %268 = vmatpush1.msra.mxu0 %v226
    %269 = vmatprep.subr.mxu0 0.0
    %270 = vmatpush1.msra.mxu0 %v225
    %271 = vmatprep.subr.mxu0 0.0
    %272 = vmatpush2.msra.mxu0 0.0
    %273 = vmatprep.subr.mxu0 0.0
    %274 = vmatpush2.msra.mxu0 0.0
    %275 = vmatprep.subr.mxu0 0.0
    %276 = vmatpush2.msra.mxu0 0.0
    %277 = vmatprep.subr.mxu0 0.0
    %278 = vmatpush2.msra.mxu0 0.0
    %279 = vmatprep.subr.mxu0 0.0
    %280 = vmatpush2.msra.mxu0 0.0
    %281 = vmatprep.subr.mxu0 0.0
    %282 = vmatpush2.msra.mxu0 0.0
    %283 = vmatprep.subr.mxu0 0.0
    %284 = vmatpush2.msra.mxu0 0.0
    %285 = vmatprep.subr.mxu0 0.0
    %286 = vmatpush2.msra.mxu0 0.0
    %287 = vmatprep.subr.mxu0 0.0
    %288 = vmatpush2.msra.mxu0 0.0
    %289 = vmatprep.subr.mxu0 0.0
    %290 = vmatpush2.msra.mxu0 0.0
    %291 = vmatprep.subr.mxu0 0.0
    %292 = vmatpush2.msra.mxu0 0.0
    %293 = vmatprep.subr.mxu0 0.0
    %294 = vmatpush2.msra.mxu0 0.0
    %295 = vmatprep.subr.mxu0 0.0
    %296 = vmatpush2.msra.mxu0 0.0
    %297 = vmatprep.subr.mxu0 0.0
    %298 = vmatpush2.msra.mxu0 0.0
    %299 = vmatprep.subr.mxu0 0.0
    %300 = vmatpush2.msra.mxu0 0.0
    %301 = vmatprep.subr.mxu0 0.0
    %302 = vmatpush2.msra.mxu0 0.0
    %303 = vmatprep.mubr.f32.mxu0 0.0
    %304 = vmatmul.mubr.f32.gmra.mxu0 %v237
    %v305 = vpop.f32.mrf.mxu0
    %v306 = vadd.f32 %v234, %v305
    %v307 = vpop.f32.mrf.mxu0
    %308 = vdwg.mxu0
    %v309 = vld [vmem:[#allocation5] sm:$0xff]
    %v310 = vadd.f32 %v306, %v309
    %311 = vst.msk [vmem:[#allocation7] sm:$0xff] %vm64, %v310
    // Predicated region
    $region42: #{tpu_custom_call.1} parent=1 // pred_check
      _
    $region43: #{tpu_custom_call.1} parent=1 // pred_check_branch
      %313 = sbr.rel (0) target = $region45
    $region44: #{tpu_custom_call.1} parent=1 // pred_region
      %s315 = ssub.s32 128, 128
      %316 = vsyncadd [#allocation4], %s315
      %s318 = sshll.u32 [#allocation7], 4
      %s319 = int_to_ptr.vmem [resolvable:$true] %s318
      %321 = dma.vmem_to_hbm [thread:$0]  %s319, 128, %s8, [#allocation4]
    $region45: #{tpu_custom_call.1} parent=1 // pred_fallthru
      _
    // Predicated region
    $region46: #{tpu_custom_call.1} parent=1 // pred_check
      _
    $region47: #{tpu_custom_call.1} parent=1 // pred_check_branch
      %323 = sbr.rel (0) target = $region49
    $region48: #{tpu_custom_call.1} parent=1 // pred_region
      %324 = dma.done [#allocation4], 128
    $region49: #{tpu_custom_call.1} parent=1 // pred_fallthru
      _
    %325 = vsyncpa [#allocation3], 1
    %326 = vsyncpa [#allocation6], 1
    %327 = vsyncpa [#allocation4], 1

</llo_original>
